<compile_context>
chip_gen: v6e
topology: v6e:2x2x1
jax: 0.10.0
libtpu: 0.0.40
codegen_flags: <defaults>
</compile_context>

<pallas_src>
import functools
import math

import jax
import jax.numpy as jnp
from jax.experimental import pallas as pl
from jax.experimental.pallas import tpu as pltpu


# ----------------------------------------------------------------------------
# Multi-output row-tiled linear:  y_i = x @ W_i + b_i   (W_i pre-transposed)
# ----------------------------------------------------------------------------
def _make_multi_linear_kernel(n_out, mm_dtype):
    def kernel(*refs):
        x_ref = refs[0]
        w_refs = refs[1:1 + n_out]
        b_refs = refs[1 + n_out:1 + 2 * n_out]
        o_refs = refs[1 + 2 * n_out:]
        x = x_ref[...].astype(mm_dtype)            # bf16 MXU operands, f32 accum
        for w_ref, b_ref, o_ref in zip(w_refs, b_refs, o_refs):
            o_ref[...] = (
                jnp.dot(x, w_ref[...], preferred_element_type=jnp.float32)
                + b_ref[...]
            ).astype(o_ref.dtype)
    return kernel


def pallas_linear_multi(x, ws_t, bs, mm_dtype=jnp.bfloat16, row_tile=512):
    """x: (N, Din) f32; ws_t[i]: (Din, Dout_i) in mm_dtype; bs[i]: (Dout_i,) f32.
    Returns list of (N, Dout_i) f32.  x is read once per row tile."""
    n, d_in = x.shape
    n_out = len(ws_t)
    d_outs = [int(w.shape[1]) for w in ws_t]

    tm = row_tile if n >= row_tile else max(8, ((n + 7) // 8) * 8)
    n_pad = pl.cdiv(n, tm) * tm
    if n_pad != n:
        x = jnp.pad(x, ((0, n_pad - n), (0, 0)))

    in_specs = [pl.BlockSpec((tm, d_in), lambda i: (i, 0))]
    in_specs += [pl.BlockSpec((d_in, do), lambda i: (0, 0)) for do in d_outs]   # resident
    in_specs += [pl.BlockSpec((1, do), lambda i: (0, 0)) for do in d_outs]      # resident

    outs = pl.pallas_call(
        _make_multi_linear_kernel(n_out, mm_dtype),
        out_shape=tuple(jax.ShapeDtypeStruct((n_pad, do), jnp.float32)
                        for do in d_outs),
        grid=(n_pad // tm,),
        in_specs=in_specs,
        out_specs=tuple(pl.BlockSpec((tm, do), lambda i: (i, 0)) for do in d_outs),
        compiler_params=pltpu.CompilerParams(
            dimension_semantics=("parallel",),
            vmem_limit_bytes=64 * 1024 * 1024),
    )(x, *ws_t, *[b.reshape(1, -1) for b in bs])

    if n_pad != n:
        outs = tuple(o[:n] for o in outs)
    return list(outs)


# ----------------------------------------------------------------------------
# Relative-position attention core.  One (batch, head-group, q-tile) per step.
# All activations are (batch, time, feature); a head group is a lane-contiguous
# column block of width gw = hg * d_k.
# ----------------------------------------------------------------------------
def _pick_head_group(num_head, d_k):
    """Largest head-group whose lane width is a multiple of 128 and <= 256;
    otherwise fall back to all heads (full feature dim, always a legal block)."""
    for hg in range(num_head, 0, -1):
        if num_head % hg:
            continue
        gw = hg * d_k
        if gw <= 256 and gw % 128 == 0:
            return hg
    return num_head


def _rel_attn_kernel(q_ref, k_ref, p_ref, v_ref, bu_ref, bv_ref, mask_ref,
                     o_ref, kp_ref, *, hg, dk, inv_sqrt_dk, mm_dtype,
                     approx_recip):
    # Cache the per-head [k_h | p_h] slabs once per (batch, head-group):
    # k and p are constant along the innermost q-tile axis.
    @pl.when(pl.program_id(2) == 0)
    def _():
        k = k_ref[0]                                     # (T2, hg*dk) f32
        p = p_ref[0]
        for hh in range(hg):
            sl = slice(hh * dk, (hh + 1) * dk)
            kp_ref[hh] = jnp.concatenate([k[:, sl], p[:, sl]],
                                         axis=-1).astype(mm_dtype)

    q = q_ref[0]                                         # (tq, hg*dk) f32
    v = v_ref[0].astype(mm_dtype)                        # (T2, hg*dk)
    bu = bu_ref[...]                                     # (1, hg*dk)
    bv = bv_ref[...]
    # Additive mask expanded in-kernel from the int8 mask (finite, no NaN on
    # fully-masked rows; no f32 bias in HBM).
    neg = jnp.where(mask_ref[0] == 0, jnp.float32(-1e30), jnp.float32(0.0))

    # Fold 1/sqrt(d_k) into the small q-side operands instead of the scores.
    qu = ((q + bu) * inv_sqrt_dk).astype(mm_dtype)
    qv = ((q + bv) * inv_sqrt_dk).astype(mm_dtype)

    ctxs = []
    for hh in range(hg):
        sl = slice(hh * dk, (hh + 1) * dk)
        # Fused score matmul: (q+bu)·k^T + (q+bv)·p^T == [qu_h|qv_h]·[k_h|p_h]^T
        q_cat = jnp.concatenate([qu[:, sl], qv[:, sl]], axis=-1)       # (tq, 2dk)
        scores = jax.lax.dot_general(
            q_cat, kp_ref[hh], (((1,), (1,)), ((), ())),
            preferred_element_type=jnp.float32)                        # (tq, T2)
        scores = scores + neg

        m = jnp.max(scores, axis=-1, keepdims=True)
        e = jnp.exp(scores - m)
        attn = e * pl.reciprocal(jnp.sum(e, axis=-1, keepdims=True),
                                 approx=approx_recip)
        attn = jnp.where(neg < 0.0, jnp.float32(0.0), attn)   # torch parity
        # TODO(synk): dropout on attn is identity at inference (p_attn = attn).
        ctxs.append(jnp.dot(attn.astype(mm_dtype), v[:, sl],
                            preferred_element_type=jnp.float32))       # (tq, dk)

    ctx = ctxs[0] if hg == 1 else jnp.concatenate(ctxs, axis=-1)       # lane-dense
    o_ref[0] = ctx.astype(o_ref.dtype)


def pallas_rel_attention(q, k, p, v, bias_u_flat, bias_v_flat, mask_i8, *,
                         num_head, d_k, matmul_dtype=jnp.bfloat16, tq=128):
    """q: (B,T1,D); k,v: (B,T2,D); p: (Bp,T2,D), Bp in {1,B}; bias_*: (1,D) f32;
    mask_i8: (B,Tm,T2) int8 (1 keep / 0 mask), Tm in {1,T1}.  Returns (B,T1,D)."""
    b, t1, d = q.shape
    t2 = k.shape[1]
    bp = p.shape[0]
    tm_mask = mask_i8.shape[1]
    assert d == num_head * d_k

    hg = _pick_head_group(num_head, d_k)
    gw = hg * d_k
    g = num_head // hg

    # Pad T1 to a multiple of the q tile (keeps live (tq, T2) blocks bounded).
    if t1 <= tq:
        tq_eff, t1p = t1, t1
    else:
        tq_eff = tq
        t1p = pl.cdiv(t1, tq) * tq
        if t1p != t1:
            q = jnp.pad(q, ((0, 0), (0, t1p - t1), (0, 0)))
            if tm_mask != 1:
                mask_i8 = jnp.pad(mask_i8, ((0, 0), (0, t1p - t1), (0, 0)))

    if bp == b:
        p_idx = lambda bi, gi, qi: (bi, 0, gi)
    else:   # n_batch_pos == 1: never broadcast pos embeddings over batch
        p_idx = lambda bi, gi, qi: (0, 0, gi)

    if tm_mask == 1:
        mask_spec = pl.BlockSpec((1, 1, t2), lambda bi, gi, qi: (bi, 0, 0))
    else:
        mask_spec = pl.BlockSpec((1, tq_eff, t2), lambda bi, gi, qi: (bi, qi, 0))

    kernel = functools.partial(
        _rel_attn_kernel, hg=hg, dk=d_k, inv_sqrt_dk=1.0 / math.sqrt(d_k),
        mm_dtype=matmul_dtype, approx_recip=(matmul_dtype != jnp.float32))

    out = pl.pallas_call(
        kernel,
        out_shape=jax.ShapeDtypeStruct((b, t1p, d), jnp.float32),
        grid=(b, g, t1p // tq_eff),
        in_specs=[
            pl.BlockSpec((1, tq_eff, gw), lambda bi, gi, qi: (bi, qi, gi)),
            pl.BlockSpec((1, t2, gw), lambda bi, gi, qi: (bi, 0, gi)),
            pl.BlockSpec((1, t2, gw), p_idx),
            pl.BlockSpec((1, t2, gw), lambda bi, gi, qi: (bi, 0, gi)),
            pl.BlockSpec((1, gw), lambda bi, gi, qi: (0, gi)),
            pl.BlockSpec((1, gw), lambda bi, gi, qi: (0, gi)),
            mask_spec,
        ],
        out_specs=pl.BlockSpec((1, tq_eff, gw), lambda bi, gi, qi: (bi, qi, gi)),
        scratch_shapes=[pltpu.VMEM((hg, t2, 2 * d_k), matmul_dtype)],
        compiler_params=pltpu.CompilerParams(
            dimension_semantics=("parallel", "parallel", "arbitrary"),
            vmem_limit_bytes=64 * 1024 * 1024),
    )(q, k, p, v, bias_u_flat, bias_v_flat, mask_i8)

    return out[:, :t1] if t1p != t1 else out


# ----------------------------------------------------------------------------
# Module wrapper
# ----------------------------------------------------------------------------
class LegacyRelPositionMHAPallas:
    def __init__(self, num_head, feat_dim, dropout_rate, key,
                 matmul_dtype=jnp.bfloat16, tq=128):
        assert feat_dim % num_head == 0
        self.h = num_head
        self.d_k = feat_dim // num_head
        self.d = feat_dim
        self.dropout_rate = dropout_rate            # identity at inference
        self.matmul_dtype = matmul_dtype
        self.tq = tq

        ks = jax.random.split(key, 10)
        scale = 1.0 / math.sqrt(feat_dim)
        f32 = jnp.float32
        u = lambda kk, shape, s: jax.random.uniform(kk, shape, f32, -s, s)
        # torch-layout originals (out_features, in_features), kept in f32
        self.w_q = u(ks[0], (feat_dim, feat_dim), scale)
        self.b_q = u(ks[1], (feat_dim,), scale)
        self.w_k = u(ks[2], (feat_dim, feat_dim), scale)
        self.b_k = u(ks[3], (feat_dim,), scale)
        self.w_v = u(ks[4], (feat_dim, feat_dim), scale)
        self.b_v = u(ks[5], (feat_dim,), scale)
        self.w_out = u(ks[6], (feat_dim, feat_dim), scale)
        self.b_out = u(ks[7], (feat_dim,), scale)
        self.w_pos = u(ks[8], (feat_dim, feat_dim), scale)
        self.b_pos = jnp.zeros((feat_dim,), f32)     # linear_pos has no bias

        xav = math.sqrt(6.0 / (num_head + self.d_k))
        kb_u, kb_v = jax.random.split(ks[9])
        self.pos_bias_u = u(kb_u, (num_head, self.d_k), xav)
        self.pos_bias_v = u(kb_v, (num_head, self.d_k), xav)

        # MXU operand copies: pre-transposed to (Din, Dout), stored in matmul_dtype
        cast = lambda w: w.T.astype(matmul_dtype)
        self.wq_t, self.wk_t, self.wv_t = cast(self.w_q), cast(self.w_k), cast(self.w_v)
        self.wout_t, self.wpos_t = cast(self.w_out), cast(self.w_pos)
        # per-head biases flattened to the (head, d_k) column layout of the
        # projected activations — consumed per head-group via a BlockSpec slice
        self.bias_u_flat = self.pos_bias_u.reshape(1, feat_dim)
        self.bias_v_flat = self.pos_bias_v.reshape(1, feat_dim)

    def __call__(self, query, key, value, mask, pos_emb):
        """query: (B,T1,D); key/value: (B,T2,D); mask: (B,1,T2)/(B,T1,T2)/None;
        pos_emb: (Bp,T2,D) with Bp in {1,B}.  Returns (B,T1,D) f32."""
        b, t1, d = query.shape
        t2 = key.shape[1]
        mm = self.matmul_dtype

        # Projections (activations stay (B, T, D); no head transposes anywhere).
        if (key is query) and (value is query):
            q2, k2, v2 = pallas_linear_multi(
                query.reshape(b * t1, d),
                [self.wq_t, self.wk_t, self.wv_t],
                [self.b_q, self.b_k, self.b_v], mm)
        else:
            (q2,) = pallas_linear_multi(query.reshape(b * t1, d),
                                        [self.wq_t], [self.b_q], mm)
            if key is value:
                k2, v2 = pallas_linear_multi(key.reshape(b * t2, d),
                                             [self.wk_t, self.wv_t],
                                             [self.b_k, self.b_v], mm)
            else:
                (k2,) = pallas_linear_multi(key.reshape(b * t2, d),
                                            [self.wk_t], [self.b_k], mm)
                (v2,) = pallas_linear_multi(value.reshape(b * t2, d),
                                            [self.wv_t], [self.b_v], mm)

        bp, tp, _ = pos_emb.shape
        (p2,) = pallas_linear_multi(pos_emb.reshape(bp * tp, d),
                                    [self.wpos_t], [self.b_pos], mm)

        q3 = q2.reshape(b, t1, d)
        k3 = k2.reshape(b, t2, d)
        v3 = v2.reshape(b, t2, d)
        p3 = p2.reshape(bp, tp, d)

        # int8 mask (1 keep / 0 masked); additive bias is built inside the kernel.
        if mask is None:
            mask_i8 = jnp.ones((b, 1, t2), jnp.int8)
        else:
            mask_i8 = (mask != 0).astype(jnp.int8)

        ctx = pallas_rel_attention(q3, k3, p3, v3,
                                   self.bias_u_flat, self.bias_v_flat, mask_i8,
                                   num_head=self.h, d_k=self.d_k,
                                   matmul_dtype=mm, tq=self.tq)   # (B, T1, D)

        (out,) = pallas_linear_multi(ctx.reshape(b * t1, d),
                                     [self.wout_t], [self.b_out], mm)
        return out.reshape(b, t1, d)


# ----------------------------------------------------------------------------
# Pure-JAX reference (mirrors the PyTorch forward, f32 everywhere)
# ----------------------------------------------------------------------------
def _reference(mod, query, key, value, mask, pos_emb):
    b, t1, d = query.shape
    t2 = key.shape[1]
    h, dk = mod.h, mod.d_k
    q = (query @ mod.w_q.T + mod.b_q).reshape(b, t1, h, dk)
    k = (key @ mod.w_k.T + mod.b_k).reshape(b, t2, h, dk).transpose(0, 2, 1, 3)
    v = (value @ mod.w_v.T + mod.b_v).reshape(b, t2, h, dk).transpose(0, 2, 1, 3)
    p = (pos_emb @ mod.w_pos.T).reshape(pos_emb.shape[0], t2, h, dk).transpose(0, 2, 1, 3)
    q_u = (q + mod.pos_bias_u).transpose(0, 2, 1, 3)
    q_v = (q + mod.pos_bias_v).transpose(0, 2, 1, 3)
    ac = jnp.einsum('bhtd,bhsd->bhts', q_u, k)
    bd = jnp.einsum('bhtd,bhsd->bhts', q_v, jnp.broadcast_to(p, k.shape))
    scores = (ac + bd) / math.sqrt(dk)
    if mask is not None:
        inv = (mask == 0)[:, None]
        scores = jnp.where(inv, -jnp.inf, scores)
        attn = jax.nn.softmax(scores, axis=-1)
        attn = jnp.where(inv, 0.0, attn)
    else:
        attn = jax.nn.softmax(scores, axis=-1)
    x = jnp.einsum('bhts,bhsd->bhtd', attn, v).transpose(0, 2, 1, 3).reshape(b, t1, d)
    return x @ mod.w_out.T + mod.b_out


# ----------------------------------------------------------------------------
if __name__ == "__main__":
    B, T, D, H = 2, 8, 32, 4
    root = jax.random.PRNGKey(0)
    k_param, k_q, k_k, k_v, k_p, k_p2, k_x3 = jax.random.split(root, 7)

    # Same parameters (same key) for the exact-f32 and fast-bf16 instances.
    mod_f32 = LegacyRelPositionMHAPallas(H, D, 0.0, key=k_param,
                                         matmul_dtype=jnp.float32)
    mod_bf16 = LegacyRelPositionMHAPallas(H, D, 0.0, key=k_param,
                                          matmul_dtype=jnp.bfloat16)

    # --- Test 1: self-attention, (B,1,T) padding mask, pos batch = 1 --------
    x = jax.random.normal(k_q, (B, T, D), jnp.float32)
    pos = jax.random.normal(k_p, (1, T, D), jnp.float32)
    mask = jnp.ones((B, 1, T), jnp.int32).at[1, 0, -2:].set(0)

    ref1 = _reference(mod_f32, x, x, x, mask, pos)
    out1 = jax.block_until_ready(mod_f32(x, x, x, mask, pos))
    assert out1.shape == (B, T, D)
    assert jnp.allclose(out1, ref1, atol=1e-4, rtol=1e-4), "f32 mismatch (self-attn)"
    out1b = jax.block_until_ready(mod_bf16(x, x, x, mask, pos))
    assert jnp.allclose(out1b, ref1, atol=3e-2, rtol=3e-2), "bf16 mismatch (self-attn)"

    # --- Test 2: cross-attention, (B,T1,T2) mask, pos batch = B, T2 != T1 ---
    T2 = 16
    query = jax.random.normal(k_q, (B, T, D), jnp.float32)
    key_t = jax.random.normal(k_k, (B, T2, D), jnp.float32)
    val_t = jax.random.normal(k_v, (B, T2, D), jnp.float32)
    pos2 = jax.random.normal(k_p2, (B, T2, D), jnp.float32)
    mask2 = jnp.ones((B, T, T2), jnp.int32).at[0, :, -3:].set(0)

    ref2 = _reference(mod_f32, query, key_t, val_t, mask2, pos2)
    out2 = jax.block_until_ready(mod_f32(query, key_t, val_t, mask2, pos2))
    assert out2.shape == (B, T, D)
    assert jnp.allclose(out2, ref2, atol=1e-4, rtol=1e-4), "f32 mismatch (cross-attn)"
    out2b = jax.block_until_ready(mod_bf16(query, key_t, val_t, mask2, pos2))
    assert jnp.allclose(out2b, ref2, atol=3e-2, rtol=3e-2), "bf16 mismatch (cross-attn)"

    # --- Test 3: T=160 (> q tile of 128) exercises q-tile padding, mask=None -
    T3 = 160
    x3 = jax.random.normal(k_x3, (B, T3, D), jnp.float32)
    pos3 = jax.random.normal(k_p, (1, T3, D), jnp.float32)
    ref3 = _reference(mod_f32, x3, x3, x3, None, pos3)
    out3 = jax.block_until_ready(mod_f32(x3, x3, x3, None, pos3))
    assert out3.shape == (B, T3, D)
    assert jnp.allclose(out3, ref3, atol=1e-4, rtol=1e-4), "f32 mismatch (tiled q)"
    out3b = jax.block_until_ready(mod_bf16(x3, x3, x3, None, pos3))
    assert jnp.allclose(out3b, ref3, atol=3e-2, rtol=3e-2), "bf16 mismatch (tiled q)"

    print("KERNEL_OK")
</pallas_src>

<mosaic_0001>
module attributes {stable_mosaic.version = 11 : i64} {
  func.func @kernel(%arg0: i32, %arg1: memref<16x32xf32, #tpu.memory_space<vmem>>, %arg2: memref<32x32xf32, #tpu.memory_space<vmem>>, %arg3: memref<32x32xf32, #tpu.memory_space<vmem>>, %arg4: memref<32x32xf32, #tpu.memory_space<vmem>>, %arg5: memref<1x32xf32, #tpu.memory_space<vmem>>, %arg6: memref<1x32xf32, #tpu.memory_space<vmem>>, %arg7: memref<1x32xf32, #tpu.memory_space<vmem>>, %arg8: memref<16x32xf32, #tpu.memory_space<vmem>>, %arg9: memref<16x32xf32, #tpu.memory_space<vmem>>, %arg10: memref<16x32xf32, #tpu.memory_space<vmem>>) attributes {dimension_semantics = [#tpu.dimension_semantics<parallel>], iteration_bounds = array<i64: 1>, scalar_prefetch = 0 : i64, scratch_operands = 0 : i64, tpu.core_type = #tpu.core_type<tc>, window_params = [{transform_indices = @transform_0, window_bounds = array<i64: 16, 32>}, {pipeline_mode = #tpu.pipeline_mode<synchronous>, transform_indices = @transform_1, window_bounds = array<i64: 32, 32>}, {pipeline_mode = #tpu.pipeline_mode<synchronous>, transform_indices = @transform_2, window_bounds = array<i64: 32, 32>}, {pipeline_mode = #tpu.pipeline_mode<synchronous>, transform_indices = @transform_3, window_bounds = array<i64: 32, 32>}, {pipeline_mode = #tpu.pipeline_mode<synchronous>, transform_indices = @transform_4, window_bounds = array<i64: 1, 32>}, {pipeline_mode = #tpu.pipeline_mode<synchronous>, transform_indices = @transform_5, window_bounds = array<i64: 1, 32>}, {pipeline_mode = #tpu.pipeline_mode<synchronous>, transform_indices = @transform_6, window_bounds = array<i64: 1, 32>}, {transform_indices = @transform_7, window_bounds = array<i64: 16, 32>}, {transform_indices = @transform_8, window_bounds = array<i64: 16, 32>}, {transform_indices = @transform_9, window_bounds = array<i64: 16, 32>}]} {
    %c0 = arith.constant 0 : index
    %c0_0 = arith.constant 0 : index
    %0 = vector.load %arg1[%c0, %c0_0] : memref<16x32xf32, #tpu.memory_space<vmem>>, vector<16x32xf32>
    %c0_1 = arith.constant 0 : index
    %c0_2 = arith.constant 0 : index
    %1 = vector.load %arg2[%c0_1, %c0_2] : memref<32x32xf32, #tpu.memory_space<vmem>>, vector<32x32xf32>
    %cst = arith.constant dense<0.000000e+00> : vector<16x32xf32>
    %2 = tpu.matmul %0, %1, %cst {dimension_numbers = #tpu.dot_dimension_numbers<[1], [0], [0], [1], [0, 0, 1, 1], [], []>} : vector<16x32xf32>, vector<32x32xf32>, vector<16x32xf32> -> vector<16x32xf32>
    %c0_3 = arith.constant 0 : index
    %c0_4 = arith.constant 0 : index
    %3 = vector.load %arg5[%c0_3, %c0_4] : memref<1x32xf32, #tpu.memory_space<vmem>>, vector<1x32xf32>
    %4 = vector.broadcast %3 : vector<1x32xf32> to vector<16x32xf32>
    %5 = arith.addf %2, %4 : vector<16x32xf32>
    %c0_5 = arith.constant 0 : index
    %c0_6 = arith.constant 0 : index
    %6 = vector.load %arg8[%c0_5, %c0_6] : memref<16x32xf32, #tpu.memory_space<vmem>>, vector<16x32xf32>
    tpu.vector_store %arg8[%c0_5, %c0_6], %5 {strides = array<i32>} : memref<16x32xf32, #tpu.memory_space<vmem>>, vector<16x32xf32>,
    %c0_7 = arith.constant 0 : index
    %c0_8 = arith.constant 0 : index
    %7 = vector.load %arg3[%c0_7, %c0_8] : memref<32x32xf32, #tpu.memory_space<vmem>>, vector<32x32xf32>
    %cst_9 = arith.constant dense<0.000000e+00> : vector<16x32xf32>
    %8 = tpu.matmul %0, %7, %cst_9 {dimension_numbers = #tpu.dot_dimension_numbers<[1], [0], [0], [1], [0, 0, 1, 1], [], []>} : vector<16x32xf32>, vector<32x32xf32>, vector<16x32xf32> -> vector<16x32xf32>
    %c0_10 = arith.constant 0 : index
    %c0_11 = arith.constant 0 : index
    %9 = vector.load %arg6[%c0_10, %c0_11] : memref<1x32xf32, #tpu.memory_space<vmem>>, vector<1x32xf32>
    %10 = vector.broadcast %9 : vector<1x32xf32> to vector<16x32xf32>
    %11 = arith.addf %8, %10 : vector<16x32xf32>
    %c0_12 = arith.constant 0 : index
    %c0_13 = arith.constant 0 : index
    %12 = vector.load %arg9[%c0_12, %c0_13] : memref<16x32xf32, #tpu.memory_space<vmem>>, vector<16x32xf32>
    tpu.vector_store %arg9[%c0_12, %c0_13], %11 {strides = array<i32>} : memref<16x32xf32, #tpu.memory_space<vmem>>, vector<16x32xf32>,
    %c0_14 = arith.constant 0 : index
    %c0_15 = arith.constant 0 : index
    %13 = vector.load %arg4[%c0_14, %c0_15] : memref<32x32xf32, #tpu.memory_space<vmem>>, vector<32x32xf32>
    %cst_16 = arith.constant dense<0.000000e+00> : vector<16x32xf32>
    %14 = tpu.matmul %0, %13, %cst_16 {dimension_numbers = #tpu.dot_dimension_numbers<[1], [0], [0], [1], [0, 0, 1, 1], [], []>} : vector<16x32xf32>, vector<32x32xf32>, vector<16x32xf32> -> vector<16x32xf32>
    %c0_17 = arith.constant 0 : index
    %c0_18 = arith.constant 0 : index
    %15 = vector.load %arg7[%c0_17, %c0_18] : memref<1x32xf32, #tpu.memory_space<vmem>>, vector<1x32xf32>
    %16 = vector.broadcast %15 : vector<1x32xf32> to vector<16x32xf32>
    %17 = arith.addf %14, %16 : vector<16x32xf32>
    %c0_19 = arith.constant 0 : index
    %c0_20 = arith.constant 0 : index
    %18 = vector.load %arg10[%c0_19, %c0_20] : memref<16x32xf32, #tpu.memory_space<vmem>>, vector<16x32xf32>
    tpu.vector_store %arg10[%c0_19, %c0_20], %17 {strides = array<i32>} : memref<16x32xf32, #tpu.memory_space<vmem>>, vector<16x32xf32>,
    return
  }
  func.func @transform_0(%arg0: i32) -> (i32, i32) {
    %c0_i32 = arith.constant 0 : i32
    %c0_i32_0 = arith.constant 0 : i32
    return %arg0, %c0_i32 : i32, i32
  }
  func.func @transform_1(%arg0: i32) -> (i32, i32) {
    %c0_i32 = arith.constant 0 : i32
    %c0_i32_0 = arith.constant 0 : i32
    %c0_i32_1 = arith.constant 0 : i32
    return %c0_i32, %c0_i32_0 : i32, i32
  }
  func.func @transform_2(%arg0: i32) -> (i32, i32) {
    %c0_i32 = arith.constant 0 : i32
    %c0_i32_0 = arith.constant 0 : i32
    %c0_i32_1 = arith.constant 0 : i32
    return %c0_i32, %c0_i32_0 : i32, i32
  }
  func.func @transform_3(%arg0: i32) -> (i32, i32) {
    %c0_i32 = arith.constant 0 : i32
    %c0_i32_0 = arith.constant 0 : i32
    %c0_i32_1 = arith.constant 0 : i32
    return %c0_i32, %c0_i32_0 : i32, i32
  }
  func.func @transform_4(%arg0: i32) -> (i32, i32) {
    %c0_i32 = arith.constant 0 : i32
    %c0_i32_0 = arith.constant 0 : i32
    %c0_i32_1 = arith.constant 0 : i32
    return %c0_i32, %c0_i32_0 : i32, i32
  }
  func.func @transform_5(%arg0: i32) -> (i32, i32) {
    %c0_i32 = arith.constant 0 : i32
    %c0_i32_0 = arith.constant 0 : i32
    %c0_i32_1 = arith.constant 0 : i32
    return %c0_i32, %c0_i32_0 : i32, i32
  }
  func.func @transform_6(%arg0: i32) -> (i32, i32) {
    %c0_i32 = arith.constant 0 : i32
    %c0_i32_0 = arith.constant 0 : i32
    %c0_i32_1 = arith.constant 0 : i32
    return %c0_i32, %c0_i32_0 : i32, i32
  }
  func.func @transform_7(%arg0: i32) -> (i32, i32) {
    %c0_i32 = arith.constant 0 : i32
    %c0_i32_0 = arith.constant 0 : i32
    return %arg0, %c0_i32 : i32, i32
  }
  func.func @transform_8(%arg0: i32) -> (i32, i32) {
    %c0_i32 = arith.constant 0 : i32
    %c0_i32_0 = arith.constant 0 : i32
    return %arg0, %c0_i32 : i32, i32
  }
  func.func @transform_9(%arg0: i32) -> (i32, i32) {
    %c0_i32 = arith.constant 0 : i32
    %c0_i32_0 = arith.constant 0 : i32
    return %arg0, %c0_i32 : i32, i32
  }
}

</mosaic_0001>

<llo_original>
// kernel: tpu_custom_call.1
$region0: #{tpu_custom_call.1}
  #allocation0 [shape = 'u32[]', space=smem, size = 0x4, offset = 0x4, fixed_abs, tag = 'smem constant byte address 0x4 - core index']
  #allocation1 [shape = 'u32[144,128]{1,0:T(1,128)}', space=vmem, size = 0x12000, scoped, tag = 'internal scratch']
  %s0 = inlined_call_operand.hbm [shape: f32[16,32], index: 0, kind: input, shape index: {}]
  %s1 = inlined_call_operand.hbm [shape: f32[32,32], index: 1, kind: input, shape index: {}]
  %s2 = inlined_call_operand.hbm [shape: f32[32,32], index: 2, kind: input, shape index: {}]
  %s3 = inlined_call_operand.hbm [shape: f32[32,32], index: 3, kind: input, shape index: {}]
  %s4 = inlined_call_operand.vmem [shape: f32[1,32], index: 4, kind: input, shape index: {}]
  %s5 = inlined_call_operand.vmem [shape: f32[1,32], index: 5, kind: input, shape index: {}]
  %s6 = inlined_call_operand.vmem [shape: f32[1,32], index: 6, kind: input, shape index: {}]
  %s7 = inlined_call_operand.hbm [shape: f32[16,32], index: 7, kind: output, shape index: {0}]
  %s8 = inlined_call_operand.hbm [shape: f32[16,32], index: 8, kind: output, shape index: {1}]
  %s9 = inlined_call_operand.hbm [shape: f32[16,32], index: 9, kind: output, shape index: {2}]
  %10 = xla_tuple %s7, %s8, %s9
  %s11 = sld [smem:[#allocation0]]
  $region70: #{tpu_custom_call.1} parent=0
    _
  %s13 = ssub.s32 1, %s11
  %s14 = scalar_select 0, %s13, %s11
  $region1: #{tpu_custom_call.1} parent=0
    #allocation2 [shape = 'u8[8192]{0}', space=vmem, size = 0x2000, scoped, tag = 'input window, operand 0, single buffered']
    #allocation3 [shape = 's32[1]{0}', space=sflag, size = 0x4, scoped, tag = 'scoped memory for tpu_custom_call.1']
    #allocation4 [shape = 's32[1]{0}', space=sflag, size = 0x4, scoped, tag = 'scoped memory for tpu_custom_call.1']
    #allocation5 [shape = 'u8[16384]{0}', space=vmem, size = 0x4000, scoped, tag = 'input window, operand 1, single buffered']
    #allocation6 [shape = 's32[1]{0}', space=sflag, size = 0x4, scoped, tag = 'scoped memory for tpu_custom_call.1']
    #allocation7 [shape = 'u8[16384]{0}', space=vmem, size = 0x4000, scoped, tag = 'input window, operand 2, single buffered']
    #allocation8 [shape = 'u8[16384]{0}', space=vmem, size = 0x4000, scoped, tag = 'input window, operand 3, single buffered']
    #allocation9 [shape = 's32[1]{0}', space=sflag, size = 0x4, scoped, tag = 'scoped memory for tpu_custom_call.1']
    #allocation10 [shape = 'u8[8192]{0}', space=vmem, size = 0x2000, scoped, tag = 'output window, operand 0, single buffered']
    #allocation11 [shape = 'u8[8192]{0}', space=vmem, size = 0x2000, scoped, tag = 'output window, operand 1, single buffered']
    #allocation12 [shape = 's32[1]{0}', space=sflag, size = 0x4, scoped, tag = 'scoped memory for tpu_custom_call.1']
    #allocation13 [shape = 'u8[8192]{0}', space=vmem, size = 0x2000, scoped, tag = 'output window, operand 2, single buffered']
    %15 = vsyncpa [#allocation3], 0
    %16 = vsyncpa [#allocation6], 0
    %17 = vsyncpa [#allocation9], 0
    %18 = vsyncpa [#allocation4], 0
    %19 = vsyncpa [#allocation12], 0
    // Predicated region
    $region2: #{tpu_custom_call.1} parent=1 // pred_check
      _
    $region3: #{tpu_custom_call.1} parent=1 // pred_check_branch
      %21 = sbr.rel (0) target = $region5
    $region4: #{tpu_custom_call.1} parent=1 // pred_region
      %s23 = ssub.s32 256, 256
      %24 = vsyncadd [#allocation3], %s23
      %s25 = sshll.u32 [#allocation2], 4
      %s26 = int_to_ptr.vmem [resolvable:$true] %s25
      %31 = dma.hbm_to_vmem [thread:$0]  %s0, 256, %s26, [#allocation3], 128, 128, 8
    $region5: #{tpu_custom_call.1} parent=1 // pred_fallthru
      _
    // Predicated region
    $region6: #{tpu_custom_call.1} parent=1 // pred_check
      _
    $region7: #{tpu_custom_call.1} parent=1 // pred_check_branch
      %33 = sbr.rel (0) target = $region9
    $region8: #{tpu_custom_call.1} parent=1 // pred_region
      %s35 = ssub.s32 512, 512
      %36 = vsyncadd [#allocation6], %s35
      %s37 = sshll.u32 [#allocation5], 4
      %s38 = int_to_ptr.vmem [resolvable:$true] %s37
      %43 = dma.hbm_to_vmem [thread:$0]  %s1, 512, %s38, [#allocation6], 128, 128, 8
    $region9: #{tpu_custom_call.1} parent=1 // pred_fallthru
      _
    // Predicated region
    $region10: #{tpu_custom_call.1} parent=1 // pred_check
      _
    $region11: #{tpu_custom_call.1} parent=1 // pred_check_branch
      %45 = sbr.rel (0) target = $region13
    $region12: #{tpu_custom_call.1} parent=1 // pred_region
      %s47 = ssub.s32 512, 512
      %48 = vsyncadd [#allocation6], %s47
      %s49 = sshll.u32 [#allocation7], 4
      %s50 = int_to_ptr.vmem [resolvable:$true] %s49
      %55 = dma.hbm_to_vmem [thread:$0]  %s2, 512, %s50, [#allocation6], 128, 128, 8
    $region13: #{tpu_custom_call.1} parent=1 // pred_fallthru
      _
    // Predicated region
    $region14: #{tpu_custom_call.1} parent=1 // pred_check
      _
    $region15: #{tpu_custom_call.1} parent=1 // pred_check_branch
      %57 = sbr.rel (0) target = $region17
    $region16: #{tpu_custom_call.1} parent=1 // pred_region
      %s59 = ssub.s32 512, 512
      %60 = vsyncadd [#allocation9], %s59
      %s61 = sshll.u32 [#allocation8], 4
      %s62 = int_to_ptr.vmem [resolvable:$true] %s61
      %67 = dma.hbm_to_vmem [thread:$0]  %s3, 512, %s62, [#allocation9], 128, 128, 8
    $region17: #{tpu_custom_call.1} parent=1 // pred_fallthru
      _
    // Predicated region
    $region18: #{tpu_custom_call.1} parent=1 // pred_check
      _
    $region19: #{tpu_custom_call.1} parent=1 // pred_check_branch
      %69 = sbr.rel (0) target = $region21
    $region20: #{tpu_custom_call.1} parent=1 // pred_region
      _
    $region21: #{tpu_custom_call.1} parent=1 // pred_fallthru
      _
    // Predicated region
    $region22: #{tpu_custom_call.1} parent=1 // pred_check
      _
    $region23: #{tpu_custom_call.1} parent=1 // pred_check_branch
      %71 = sbr.rel (0) target = $region25
    $region24: #{tpu_custom_call.1} parent=1 // pred_region
      _
    $region25: #{tpu_custom_call.1} parent=1 // pred_fallthru
      _
    // Predicated region
    $region26: #{tpu_custom_call.1} parent=1 // pred_check
      _
    $region27: #{tpu_custom_call.1} parent=1 // pred_check_branch
      %73 = sbr.rel (0) target = $region29
    $region28: #{tpu_custom_call.1} parent=1 // pred_region
      _
    $region29: #{tpu_custom_call.1} parent=1 // pred_fallthru
      _
    // Predicated region
    $region30: #{tpu_custom_call.1} parent=1 // pred_check
      _
    $region31: #{tpu_custom_call.1} parent=1 // pred_check_branch
      %75 = sbr.rel (0) target = $region33
    $region32: #{tpu_custom_call.1} parent=1 // pred_region
      %76 = dma.done [#allocation3], 256
    $region33: #{tpu_custom_call.1} parent=1 // pred_fallthru
      _
    // Predicated region
    $region34: #{tpu_custom_call.1} parent=1 // pred_check
      _
    $region35: #{tpu_custom_call.1} parent=1 // pred_check_branch
      %78 = sbr.rel (0) target = $region37
    $region36: #{tpu_custom_call.1} parent=1 // pred_region
      %79 = dma.done [#allocation6], 512
    $region37: #{tpu_custom_call.1} parent=1 // pred_fallthru
      _
    // Predicated region
    $region38: #{tpu_custom_call.1} parent=1 // pred_check
      _
    $region39: #{tpu_custom_call.1} parent=1 // pred_check_branch
      %81 = sbr.rel (0) target = $region41
    $region40: #{tpu_custom_call.1} parent=1 // pred_region
      %82 = dma.done [#allocation6], 512
    $region41: #{tpu_custom_call.1} parent=1 // pred_fallthru
      _
    // Predicated region
    $region42: #{tpu_custom_call.1} parent=1 // pred_check
      _
    $region43: #{tpu_custom_call.1} parent=1 // pred_check_branch
      %84 = sbr.rel (0) target = $region45
    $region44: #{tpu_custom_call.1} parent=1 // pred_region
      %85 = dma.done [#allocation9], 512
    $region45: #{tpu_custom_call.1} parent=1 // pred_fallthru
      _
    %v86 = vld [vmem:[#allocation2] sm:$0xff]
    %v87 = vld [vmem:[#allocation2 + $0x8] sm:$0xff]
    %v88 = vld [vmem:[#allocation5] sm:$0xff]
    %v89 = vld [vmem:[#allocation5 + $0x8] sm:$0xff]
    %v90 = vld [vmem:[#allocation5 + $0x10] sm:$0xff]
    %v91 = vld [vmem:[#allocation5 + $0x18] sm:$0xff]
    %v92 = vld [vmem:[%s4] sm:$0x1]
    %v94 = vlaneseq
    %v95 = vshrl.u32 %v94, 7
    %v96 = vsub.s32 0, %v95
    %v97 = vrot.slane %v92, %v96
    %vm99 = vcmask 261120
    %v101 = vsel %vm99, %v86, 0
    %v104 = vsel %vm99, %v87, 0
    %106 = vmatprep.subr.mxu0 0.0
    %107 = vmatpush1.msra.mxu0 0.0
    %108 = vmatprep.subr.mxu0 0.0
    %109 = vmatpush1.msra.mxu0 0.0
    %110 = vmatprep.subr.mxu0 0.0
    %111 = vmatpush1.msra.mxu0 0.0
    %112 = vmatprep.subr.mxu0 0.0
    %113 = vmatpush1.msra.mxu0 0.0
    %114 = vmatprep.subr.mxu0 0.0
    %115 = vmatpush1.msra.mxu0 0.0
    %116 = vmatprep.subr.mxu0 0.0
    %117 = vmatpush1.msra.mxu0 0.0
    %118 = vmatprep.subr.mxu0 0.0
    %119 = vmatpush1.msra.mxu0 0.0
    %120 = vmatprep.subr.mxu0 0.0
    %121 = vmatpush1.msra.mxu0 0.0
    %122 = vmatprep.subr.mxu0 0.0
    %123 = vmatpush1.msra.mxu0 0.0
    %124 = vmatprep.subr.mxu0 0.0
    %125 = vmatpush1.msra.mxu0 0.0
    %126 = vmatprep.subr.mxu0 0.0
    %127 = vmatpush1.msra.mxu0 0.0
    %128 = vmatprep.subr.mxu0 0.0
    %129 = vmatpush1.msra.mxu0 0.0
    %130 = vmatprep.subr.mxu0 0.0
    %131 = vmatpush1.msra.mxu0 %v91
    %132 = vmatprep.subr.mxu0 0.0
    %133 = vmatpush1.msra.mxu0 %v90
    %134 = vmatprep.subr.mxu0 0.0
    %135 = vmatpush1.msra.mxu0 %v89
    %136 = vmatprep.subr.mxu0 0.0
    %137 = vmatpush1.msra.mxu0 %v88
    %138 = vmatprep.subr.mxu0 0.0
    %139 = vmatpush2.msra.mxu0 0.0
    %140 = vmatprep.subr.mxu0 0.0
    %141 = vmatpush2.msra.mxu0 0.0
    %142 = vmatprep.subr.mxu0 0.0
    %143 = vmatpush2.msra.mxu0 0.0
    %144 = vmatprep.subr.mxu0 0.0
    %145 = vmatpush2.msra.mxu0 0.0
    %146 = vmatprep.subr.mxu0 0.0
    %147 = vmatpush2.msra.mxu0 0.0
    %148 = vmatprep.subr.mxu0 0.0
    %149 = vmatpush2.msra.mxu0 0.0
    %150 = vmatprep.subr.mxu0 0.0
    %151 = vmatpush2.msra.mxu0 0.0
    %152 = vmatprep.subr.mxu0 0.0
    %153 = vmatpush2.msra.mxu0 0.0
    %154 = vmatprep.subr.mxu0 0.0
    %155 = vmatpush2.msra.mxu0 0.0
    %156 = vmatprep.subr.mxu0 0.0
    %157 = vmatpush2.msra.mxu0 0.0
    %158 = vmatprep.subr.mxu0 0.0
    %159 = vmatpush2.msra.mxu0 0.0
    %160 = vmatprep.subr.mxu0 0.0
    %161 = vmatpush2.msra.mxu0 0.0
    %162 = vmatprep.subr.mxu0 0.0
    %163 = vmatpush2.msra.mxu0 0.0
    %164 = vmatprep.subr.mxu0 0.0
    %165 = vmatpush2.msra.mxu0 0.0
    %166 = vmatprep.subr.mxu0 0.0
    %167 = vmatpush2.msra.mxu0 0.0
    %168 = vmatprep.subr.mxu0 0.0
    %169 = vmatpush2.msra.mxu0 0.0
    %170 = vmatprep.mubr.f32.mxu0 0.0
    %171 = vmatmul.mubr.f32.gmra.mxu0 %v101
    %v172 = vpop.f32.mrf.mxu0
    %v173 = vadd.f32 %v97, %v172
    %v174 = vpop.f32.mrf.mxu0
    %175 = vmatprep.mubr.f32.mxu0 0.0
    %176 = vmatmul.mubr.f32.gmra.mxu0 %v104
    %v177 = vpop.f32.mrf.mxu0
    %v178 = vadd.f32 %v97, %v177
    %v179 = vpop.f32.mrf.mxu0
    %180 = vdwg.mxu0
    %181 = vst.msk [vmem:[#allocation10] sm:$0xff] %vm99, %v173
    %182 = vst.msk [vmem:[#allocation10 + $0x8] sm:$0xff] %vm99, %v178
    %v183 = vld [vmem:[#allocation7] sm:$0xff]
    %v184 = vld [vmem:[#allocation7 + $0x8] sm:$0xff]
    %v185 = vld [vmem:[#allocation7 + $0x10] sm:$0xff]
    %v186 = vld [vmem:[#allocation7 + $0x18] sm:$0xff]
    %v187 = vld [vmem:[%s5] sm:$0x1]
    %v189 = vlaneseq
    %v190 = vshrl.u32 %v189, 7
    %v191 = vsub.s32 0, %v190
    %v192 = vrot.slane %v187, %v191
    %194 = vmatprep.subr.mxu0 0.0
    %195 = vmatpush1.msra.mxu0 0.0
    %196 = vmatprep.subr.mxu0 0.0
    %197 = vmatpush1.msra.mxu0 0.0
    %198 = vmatprep.subr.mxu0 0.0
    %199 = vmatpush1.msra.mxu0 0.0
    %200 = vmatprep.subr.mxu0 0.0
    %201 = vmatpush1.msra.mxu0 0.0
    %202 = vmatprep.subr.mxu0 0.0
    %203 = vmatpush1.msra.mxu0 0.0
    %204 = vmatprep.subr.mxu0 0.0
    %205 = vmatpush1.msra.mxu0 0.0
    %206 = vmatprep.subr.mxu0 0.0
    %207 = vmatpush1.msra.mxu0 0.0
    %208 = vmatprep.subr.mxu0 0.0
    %209 = vmatpush1.msra.mxu0 0.0
    %210 = vmatprep.subr.mxu0 0.0
    %211 = vmatpush1.msra.mxu0 0.0
    %212 = vmatprep.subr.mxu0 0.0
    %213 = vmatpush1.msra.mxu0 0.0
    %214 = vmatprep.subr.mxu0 0.0
    %215 = vmatpush1.msra.mxu0 0.0
    %216 = vmatprep.subr.mxu0 0.0
    %217 = vmatpush1.msra.mxu0 0.0
    %218 = vmatprep.subr.mxu0 0.0
    %219 = vmatpush1.msra.mxu0 %v186
    %220 = vmatprep.subr.mxu0 0.0
    %221 = vmatpush1.msra.mxu0 %v185
    %222 = vmatprep.subr.mxu0 0.0
    %223 = vmatpush1.msra.mxu0 %v184
    %224 = vmatprep.subr.mxu0 0.0
    %225 = vmatpush1.msra.mxu0 %v183
    %226 = vmatprep.subr.mxu0 0.0
    %227 = vmatpush2.msra.mxu0 0.0
    %228 = vmatprep.subr.mxu0 0.0
    %229 = vmatpush2.msra.mxu0 0.0
    %230 = vmatprep.subr.mxu0 0.0
    %231 = vmatpush2.msra.mxu0 0.0
    %232 = vmatprep.subr.mxu0 0.0
    %233 = vmatpush2.msra.mxu0 0.0
    %234 = vmatprep.subr.mxu0 0.0
    %235 = vmatpush2.msra.mxu0 0.0
    %236 = vmatprep.subr.mxu0 0.0
    %237 = vmatpush2.msra.mxu0 0.0
    %238 = vmatprep.subr.mxu0 0.0
    %239 = vmatpush2.msra.mxu0 0.0
    %240 = vmatprep.subr.mxu0 0.0
    %241 = vmatpush2.msra.mxu0 0.0
    %242 = vmatprep.subr.mxu0 0.0
    %243 = vmatpush2.msra.mxu0 0.0
    %244 = vmatprep.subr.mxu0 0.0
    %245 = vmatpush2.msra.mxu0 0.0
    %246 = vmatprep.subr.mxu0 0.0
    %247 = vmatpush2.msra.mxu0 0.0
    %248 = vmatprep.subr.mxu0 0.0
    %249 = vmatpush2.msra.mxu0 0.0
    %250 = vmatprep.subr.mxu0 0.0
    %251 = vmatpush2.msra.mxu0 0.0
    %252 = vmatprep.subr.mxu0 0.0
    %253 = vmatpush2.msra.mxu0 0.0
    %254 = vmatprep.subr.mxu0 0.0
    %255 = vmatpush2.msra.mxu0 0.0
    %256 = vmatprep.subr.mxu0 0.0
    %257 = vmatpush2.msra.mxu0 0.0
    %258 = vmatprep.mubr.f32.mxu0 0.0
    %259 = vmatmul.mubr.f32.gmra.mxu0 %v101
    %v260 = vpop.f32.mrf.mxu0
    %v261 = vadd.f32 %v192, %v260
    %v262 = vpop.f32.mrf.mxu0
    %263 = vmatprep.mubr.f32.mxu0 0.0
    %264 = vmatmul.mubr.f32.gmra.mxu0 %v104
    %v265 = vpop.f32.mrf.mxu0
    %v266 = vadd.f32 %v192, %v265
    %v267 = vpop.f32.mrf.mxu0
    %268 = vdwg.mxu0
    %269 = vst.msk [vmem:[#allocation11] sm:$0xff] %vm99, %v261
    %270 = vst.msk [vmem:[#allocation11 + $0x8] sm:$0xff] %vm99, %v266
    %v271 = vld [vmem:[#allocation8] sm:$0xff]
    %v272 = vld [vmem:[#allocation8 + $0x8] sm:$0xff]
    %v273 = vld [vmem:[#allocation8 + $0x10] sm:$0xff]
    %v274 = vld [vmem:[#allocation8 + $0x18] sm:$0xff]
    %v275 = vld [vmem:[%s6] sm:$0x1]
    %v277 = vlaneseq
    %v278 = vshrl.u32 %v277, 7
    %v279 = vsub.s32 0, %v278
    %v280 = vrot.slane %v275, %v279
    %282 = vmatprep.subr.mxu0 0.0
    %283 = vmatpush1.msra.mxu0 0.0
    %284 = vmatprep.subr.mxu0 0.0
    %285 = vmatpush1.msra.mxu0 0.0
    %286 = vmatprep.subr.mxu0 0.0
    %287 = vmatpush1.msra.mxu0 0.0
    %288 = vmatprep.subr.mxu0 0.0
    %289 = vmatpush1.msra.mxu0 0.0
    %290 = vmatprep.subr.mxu0 0.0
    %291 = vmatpush1.msra.mxu0 0.0
    %292 = vmatprep.subr.mxu0 0.0
    %293 = vmatpush1.msra.mxu0 0.0
    %294 = vmatprep.subr.mxu0 0.0
    %295 = vmatpush1.msra.mxu0 0.0
    %296 = vmatprep.subr.mxu0 0.0
    %297 = vmatpush1.msra.mxu0 0.0
    %298 = vmatprep.subr.mxu0 0.0
    %299 = vmatpush1.msra.mxu0 0.0
    %300 = vmatprep.subr.mxu0 0.0
    %301 = vmatpush1.msra.mxu0 0.0
    %302 = vmatprep.subr.mxu0 0.0
    %303 = vmatpush1.msra.mxu0 0.0
    %304 = vmatprep.subr.mxu0 0.0
    %305 = vmatpush1.msra.mxu0 0.0
    %306 = vmatprep.subr.mxu0 0.0
    %307 = vmatpush1.msra.mxu0 %v274
    %308 = vmatprep.subr.mxu0 0.0
    %309 = vmatpush1.msra.mxu0 %v273
    %310 = vmatprep.subr.mxu0 0.0
    %311 = vmatpush1.msra.mxu0 %v272
    %312 = vmatprep.subr.mxu0 0.0
    %313 = vmatpush1.msra.mxu0 %v271
    %314 = vmatprep.subr.mxu0 0.0
    %315 = vmatpush2.msra.mxu0 0.0
    %316 = vmatprep.subr.mxu0 0.0
    %317 = vmatpush2.msra.mxu0 0.0
    %318 = vmatprep.subr.mxu0 0.0
    %319 = vmatpush2.msra.mxu0 0.0
    %320 = vmatprep.subr.mxu0 0.0
    %321 = vmatpush2.msra.mxu0 0.0
    %322 = vmatprep.subr.mxu0 0.0
    %323 = vmatpush2.msra.mxu0 0.0
    %324 = vmatprep.subr.mxu0 0.0
    %325 = vmatpush2.msra.mxu0 0.0
    %326 = vmatprep.subr.mxu0 0.0
    %327 = vmatpush2.msra.mxu0 0.0
    %328 = vmatprep.subr.mxu0 0.0
    %329 = vmatpush2.msra.mxu0 0.0
    %330 = vmatprep.subr.mxu0 0.0
    %331 = vmatpush2.msra.mxu0 0.0
    %332 = vmatprep.subr.mxu0 0.0
    %333 = vmatpush2.msra.mxu0 0.0
    %334 = vmatprep.subr.mxu0 0.0
    %335 = vmatpush2.msra.mxu0 0.0
    %336 = vmatprep.subr.mxu0 0.0
    %337 = vmatpush2.msra.mxu0 0.0
    %338 = vmatprep.subr.mxu0 0.0
    %339 = vmatpush2.msra.mxu0 0.0
    %340 = vmatprep.subr.mxu0 0.0
    %341 = vmatpush2.msra.mxu0 0.0
    %342 = vmatprep.subr.mxu0 0.0
    %343 = vmatpush2.msra.mxu0 0.0
    %344 = vmatprep.subr.mxu0 0.0
    %345 = vmatpush2.msra.mxu0 0.0
    %346 = vmatprep.mubr.f32.mxu0 0.0
    %347 = vmatmul.mubr.f32.gmra.mxu0 %v101
    %v348 = vpop.f32.mrf.mxu0
    %v349 = vadd.f32 %v280, %v348
    %v350 = vpop.f32.mrf.mxu0
    %351 = vmatprep.mubr.f32.mxu0 0.0
    %352 = vmatmul.mubr.f32.gmra.mxu0 %v104
    %v353 = vpop.f32.mrf.mxu0
    %v354 = vadd.f32 %v280, %v353
    %v355 = vpop.f32.mrf.mxu0
    %356 = vdwg.mxu0
    %357 = vst.msk [vmem:[#allocation13] sm:$0xff] %vm99, %v349
    %358 = vst.msk [vmem:[#allocation13 + $0x8] sm:$0xff] %vm99, %v354
    // Predicated region
    $region46: #{tpu_custom_call.1} parent=1 // pred_check
      _
    $region47: #{tpu_custom_call.1} parent=1 // pred_check_branch
      %360 = sbr.rel (0) target = $region49
    $region48: #{tpu_custom_call.1} parent=1 // pred_region
      %s362 = ssub.s32 256, 256
      %363 = vsyncadd [#allocation4], %s362
      %s364 = sshll.u32 [#allocation10], 4
      %s365 = int_to_ptr.vmem [resolvable:$true] %s364
      %370 = dma.vmem_to_hbm [thread:$0]  %s365, 256, %s7, [#allocation4], 128, 128, 8
    $region49: #{tpu_custom_call.1} parent=1 // pred_fallthru
      _
    // Predicated region
    $region50: #{tpu_custom_call.1} parent=1 // pred_check
      _
    $region51: #{tpu_custom_call.1} parent=1 // pred_check_branch
      %372 = sbr.rel (0) target = $region53
    $region52: #{tpu_custom_call.1} parent=1 // pred_region
      %s374 = ssub.s32 256, 256
      %375 = vsyncadd [#allocation12], %s374
      %s376 = sshll.u32 [#allocation11], 4
      %s377 = int_to_ptr.vmem [resolvable:$true] %s376
      %382 = dma.vmem_to_hbm [thread:$0]  %s377, 256, %s8, [#allocation12], 128, 128, 8
    $region53: #{tpu_custom_call.1} parent=1 // pred_fallthru
      _
    // Predicated region
    $region54: #{tpu_custom_call.1} parent=1 // pred_check
      _
    $region55: #{tpu_custom_call.1} parent=1 // pred_check_branch
      %384 = sbr.rel (0) target = $region57
    $region56: #{tpu_custom_call.1} parent=1 // pred_region
      %s386 = ssub.s32 256, 256
      %387 = vsyncadd [#allocation12], %s386
      %s388 = sshll.u32 [#allocation13], 4
      %s389 = int_to_ptr.vmem [resolvable:$true] %s388
      %394 = dma.vmem_to_hbm [thread:$0]  %s389, 256, %s9, [#allocation12], 128, 128, 8
    $region57: #{tpu_custom_call.1} parent=1 // pred_fallthru
      _
    // Predicated region
    $region58: #{tpu_custom_call.1} parent=1 // pred_check
      _
    $region59: #{tpu_custom_call.1} parent=1 // pred_check_branch
      %396 = sbr.rel (0) target = $region61
    $region60: #{tpu_custom_call.1} parent=1 // pred_region
      %397 = dma.done [#allocation4], 256
    $region61: #{tpu_custom_call.1} parent=1 // pred_fallthru
      _
    // Predicated region
    $region62: #{tpu_custom_call.1} parent=1 // pred_check
      _
    $region63: #{tpu_custom_call.1} parent=1 // pred_check_branch
      %399 = sbr.rel (0) target = $region65
    $region64: #{tpu_custom_call.1} parent=1 // pred_region
      %400 = dma.done [#allocation12], 256
    $region65: #{tpu_custom_call.1} parent=1 // pred_fallthru
      _
    // Predicated region
    $region66: #{tpu_custom_call.1} parent=1 // pred_check
      _
    $region67: #{tpu_custom_call.1} parent=1 // pred_check_branch
      %402 = sbr.rel (0) target = $region69
    $region68: #{tpu_custom_call.1} parent=1 // pred_region
      %403 = dma.done [#allocation12], 256
    $region69: #{tpu_custom_call.1} parent=1 // pred_fallthru
      _
    %404 = vsyncpa [#allocation3], 1
    %405 = vsyncpa [#allocation6], 1
    %406 = vsyncpa [#allocation9], 1
    %407 = vsyncpa [#allocation4], 1
    %408 = vsyncpa [#allocation12], 1

</llo_original>
